<compile_context>
chip_gen: v7x
topology: tpu7x:2x2x1
jax: 0.10.0
libtpu: 0.0.40
codegen_flags: <defaults>
</compile_context>

<pallas_src>
import functools

import jax
import jax.numpy as jnp
from jax import lax
from jax.experimental import pallas as pl
from jax.experimental.pallas import tpu as pltpu


# ---------------------------------------------------------------------------
# Fused kernel: projections + L2 norm + logits / label_sim + soft CE loss
# ---------------------------------------------------------------------------
def _fused_contrastive_kernel(scale_ref,    # SMEM (1,1)   f32 : logit scale
                              img_ref,      # VMEM (Br,Fp) f32 : flattened image input
                              w_img_ref,    # VMEM (Fp,Dp) f32/bf16
                              b_img_ref,    # VMEM (1, Dp) f32
                              txt_ref,      # VMEM (Bc,Ep) f32 : pooled text input
                              w_txt_ref,    # VMEM (Ep,Dp) f32/bf16
                              b_txt_ref,    # VMEM (1, Dp) f32
                              img_lab_ref,  # VMEM (Br,Kp) f32
                              txt_lab_ref,  # VMEM (Bc,Kp) f32
                              logits_ref,   # VMEM (Br,Bc) f32 out : logits_per_img
                              loss_ref,     # SMEM (1,1)   f32 out : scalar loss
                              *, batch, use_bf16):
    f32 = jnp.float32
    mm_dt = jnp.bfloat16 if use_bf16 else f32
    dn_ab = (((1,), (0,)), ((), ()))     # A @ B
    dn_abt = (((1,), (1,)), ((), ()))    # A @ B^T (contract last dims; no transpose)

    scale = scale_ref[0, 0]

    # ---- encoders: linear projection (MXU) + L2 normalize (EUP rsqrt) ------
    img_emb = lax.dot_general(img_ref[...].astype(mm_dt), w_img_ref[...],
                              dn_ab, preferred_element_type=f32) + b_img_ref[...]
    txt_emb = lax.dot_general(txt_ref[...].astype(mm_dt), w_txt_ref[...],
                              dn_ab, preferred_element_type=f32) + b_txt_ref[...]

    def l2_normalize(x):
        ss = jnp.sum(x * x, axis=-1, keepdims=True)
        return x * lax.rsqrt(jnp.maximum(ss, f32(1e-12)))  # guards all-zero pad rows

    # fold the logit scale once into the (rows, D) image embeddings
    img_emb = l2_normalize(img_emb) * scale
    txt_emb = l2_normalize(txt_emb)

    # ---- similarity matmuls (single (B,B,D) pass; labels are cheap at K) ----
    logits = lax.dot_general(img_emb.astype(mm_dt), txt_emb.astype(mm_dt),
                             dn_abt, preferred_element_type=f32)
    label_sim = lax.dot_general(img_lab_ref[...].astype(mm_dt),
                                txt_lab_ref[...].astype(mm_dt),
                                dn_abt, preferred_element_type=f32)

    logits_ref[...] = logits            # lane-dense (columns padded to 128) store

    # ---- masking setup: small vector masks instead of (B,B) iota masks -----
    rows, cols = logits.shape
    col_valid = lax.broadcasted_iota(jnp.int32, (1, cols), 1) < batch   # (1, Bc)
    row_valid = lax.broadcasted_iota(jnp.int32, (rows, 1), 0) < batch   # (Br, 1)
    neg_big = f32(-1e30)                # finite; -inf would give 0 * -inf = NaN
    inv_n = f32(1.0 / batch)
    zero = f32(0.0)

    # ---- pass 1: image loss — softmax over TEXT columns (lane-axis reduce) --
    def log_softmax_over_cols(x):
        xm = jnp.where(col_valid, x, neg_big)
        m = jnp.max(xm, axis=-1, keepdims=True)
        z = xm - m
        return z - jnp.log(jnp.sum(jnp.exp(z), axis=-1, keepdims=True))

    logp = log_softmax_over_cols(logits)
    tgt = jnp.exp(log_softmax_over_cols(label_sim))   # softmax = exp(log_softmax)
    # padded columns: tgt == exp(-1e30 - lse) == 0 exactly -> only row mask needed
    image_loss = -jnp.sum(jnp.where(row_valid, tgt * logp, zero)) * inv_n

    # ---- pass 2: caption loss — softmax over IMAGE rows (sublane reduce) ----
    # Reuses logits / label_sim: no transposed matmul, no explicit transpose.
    def log_softmax_over_rows(x):
        xm = jnp.where(row_valid, x, neg_big)
        m = jnp.max(xm, axis=0, keepdims=True)
        z = xm - m
        return z - jnp.log(jnp.sum(jnp.exp(z), axis=0, keepdims=True))

    logp_t = log_softmax_over_rows(logits)
    tgt_t = jnp.exp(log_softmax_over_rows(label_sim))
    caption_loss = -jnp.sum(jnp.where(col_valid, tgt_t * logp_t, zero)) * inv_n

    loss_ref[0, 0] = (image_loss + caption_loss) * f32(0.5)


# ---------------------------------------------------------------------------
# Wrapper helpers
# ---------------------------------------------------------------------------
def _round_up(x, m):
    return ((x + m - 1) // m) * m


def _pad2(x, rows, cols):
    r, c = x.shape
    if r == rows and c == cols:
        return x
    return jnp.pad(x, ((0, rows - r), (0, cols - c)))


def prepare_params(params, *, use_bf16=True):
    """Pad weights lane-dense and (optionally) pre-cast to bf16 ONCE,
    outside the per-training-step loss call."""
    w_img = jnp.asarray(params["w_img"], jnp.float32)
    w_txt = jnp.asarray(params["w_txt"], jnp.float32)
    F, D = w_img.shape
    E = w_txt.shape[0]
    Fp, Ep, Dp = _round_up(F, 128), _round_up(E, 128), _round_up(D, 128)
    mm_dt = jnp.bfloat16 if use_bf16 else jnp.float32
    return {
        "w_img": _pad2(w_img, Fp, Dp).astype(mm_dt),
        "w_txt": _pad2(w_txt, Ep, Dp).astype(mm_dt),
        "b_img": _pad2(jnp.asarray(params["b_img"], jnp.float32).reshape(1, -1), 1, Dp),
        "b_txt": _pad2(jnp.asarray(params["b_txt"], jnp.float32).reshape(1, -1), 1, Dp),
        "logit_scale": jnp.asarray(params["logit_scale"], jnp.float32).reshape(1, 1),
    }


def contrastive_forward_pallas(prepared, text_input, img_input,
                               img_labels, text_labels):
    """Fused CLIP-style encoder + soft contrastive loss. Returns dict."""
    if img_labels is None or text_labels is None:
        raise NotImplementedError("labels should be given!")

    use_bf16 = prepared["w_img"].dtype == jnp.bfloat16

    B = img_input.shape[0]
    # synthetic CLIP-style encoder front-end (the wrapped `model` is arbitrary)
    img_flat = img_input.reshape(B, -1).astype(jnp.float32)
    txt_pooled = jnp.mean(text_input.astype(jnp.float32), axis=1)

    Fp, Dp = prepared["w_img"].shape
    Ep = prepared["w_txt"].shape[0]
    K = img_labels.shape[1]
    Kp = _round_up(K, 128)

    # Only lane-facing dims go to 128; pure sublane (image-row) dims go to 8.
    Br = _round_up(B, 8)       # image rows  -> sublane axis of logits
    Bc = _round_up(B, 128)     # text rows   -> lane axis (columns) of logits

    args = (
        prepared["logit_scale"],
        _pad2(img_flat, Br, Fp),
        prepared["w_img"],
        prepared["b_img"],
        _pad2(txt_pooled, Bc, Ep),
        prepared["w_txt"],
        prepared["b_txt"],
        _pad2(img_labels.astype(jnp.float32), Br, Kp),
        _pad2(text_labels.astype(jnp.float32), Bc, Kp),
    )

    # Cost estimate + scoped-VMEM sizing from the actual padded operands.
    in_bytes = sum(int(a.size) * a.dtype.itemsize for a in args)
    out_bytes = Br * Bc * 4 + 4
    flops = 2 * (Br * Fp * Dp + Bc * Ep * Dp + Br * Bc * Dp + Br * Bc * Kp)
    transcendentals = 4 * Br * Bc + 2 * (Br + Bc)
    cost = pl.CostEstimate(flops=flops, transcendentals=transcendentals,
                           bytes_accessed=in_bytes + out_bytes)
    vmem_need = in_bytes + out_bytes + 4 * (Br * Bc + (Br + Bc) * Dp) * 4
    vmem_limit = int(min(64 * 1024 * 1024, max(2 * vmem_need, 8 * 1024 * 1024)))

    kernel = functools.partial(_fused_contrastive_kernel,
                               batch=B, use_bf16=use_bf16)

    logits_p, loss = pl.pallas_call(
        kernel,
        out_shape=(jax.ShapeDtypeStruct((Br, Bc), jnp.float32),
                   jax.ShapeDtypeStruct((1, 1), jnp.float32)),
        in_specs=[pl.BlockSpec(memory_space=pltpu.MemorySpace.SMEM)]      # scale
                 + [pl.BlockSpec(memory_space=pltpu.MemorySpace.VMEM)] * 8,
        out_specs=(pl.BlockSpec(memory_space=pltpu.MemorySpace.VMEM),     # logits
                   pl.BlockSpec(memory_space=pltpu.MemorySpace.SMEM)),    # loss
        compiler_params=pltpu.CompilerParams(vmem_limit_bytes=vmem_limit),
        cost_estimate=cost,
    )(*args)

    return {"logits": logits_p[:B, :B], "loss_value": loss[0, 0]}


def image_text_contrastive_loss_forward(prepared, text_input, img_input,
                                        img_labels, text_labels):
    """Equivalent of ImageTextContrastiveLoss.forward (labels must be given)."""
    return contrastive_forward_pallas(prepared, text_input, img_input,
                                      img_labels, text_labels)


# ---------------------------------------------------------------------------
# Synthetic CLIP-style model params (the wrapped `model` is arbitrary)
# ---------------------------------------------------------------------------
def init_params(key, C, H, W, L, E, D):
    del L
    k1, k2 = jax.random.split(key, 2)
    return {
        "w_img": jax.random.normal(k1, (C * H * W, D), jnp.float32) * 0.02,
        "b_img": jnp.zeros((D,), jnp.float32),
        "w_txt": jax.random.normal(k2, (E, D), jnp.float32) * 0.02,
        "b_txt": jnp.zeros((D,), jnp.float32),
        "logit_scale": jnp.float32(10.0),
    }


# ---------------------------------------------------------------------------
# Pure-JAX reference (independent check of logits + loss)
# ---------------------------------------------------------------------------
def _reference_forward(params, text_input, img_input, img_labels, text_labels):
    hp = lax.Precision.HIGHEST
    B = img_input.shape[0]
    img_emb = jnp.dot(img_input.reshape(B, -1), params["w_img"],
                      precision=hp) + params["b_img"]
    img_emb = img_emb / jnp.linalg.norm(img_emb, axis=-1, keepdims=True)
    txt_emb = jnp.dot(text_input.mean(axis=1), params["w_txt"],
                      precision=hp) + params["b_txt"]
    txt_emb = txt_emb / jnp.linalg.norm(txt_emb, axis=-1, keepdims=True)
    logits = params["logit_scale"] * jnp.dot(img_emb, txt_emb.T, precision=hp)
    label_sim = jnp.dot(img_labels, text_labels.T, precision=hp)

    def soft_xent(inp, tgt):
        logp = jax.nn.log_softmax(inp, axis=1)
        return -(tgt * logp).sum() / inp.shape[0]

    image_loss = soft_xent(logits, jax.nn.softmax(label_sim, axis=1))
    caption_loss = soft_xent(logits.T, jax.nn.softmax(label_sim.T, axis=1))
    return logits, (image_loss + caption_loss) * 0.5


if __name__ == "__main__":
    B, C, H, W = 8, 4, 16, 16      # batch, channels, spatial
    L, E = 8, 32                   # text seq len, text embed dim
    D = 32                         # joint projection dim
    K = 16                         # number of diagnosis classes

    key = jax.random.PRNGKey(0)
    k_img, k_txt, k_il, k_tl, k_par = jax.random.split(key, 5)

    img_input = jax.random.normal(k_img, (B, C, H, W), jnp.float32)
    text_input = jax.random.normal(k_txt, (B, L, E), jnp.float32)
    # labels in {-1, 0, 1} as described in the module docstring
    img_labels = jax.random.randint(k_il, (B, K), -1, 2).astype(jnp.float32)
    text_labels = jax.random.randint(k_tl, (B, K), -1, 2).astype(jnp.float32)

    params = init_params(k_par, C, H, W, L, E, D)
    ref_logits, ref_loss = _reference_forward(
        params, text_input, img_input, img_labels, text_labels)

    fwd = jax.jit(image_text_contrastive_loss_forward)

    # ---- exact path: f32 MXU inputs (tight check) ---------------------------
    prep_f32 = prepare_params(params, use_bf16=False)
    out = fwd(prep_f32, text_input, img_input, img_labels, text_labels)
    logits = jax.block_until_ready(out["logits"])
    loss = jax.block_until_ready(out["loss_value"])
    assert logits.shape == (B, B), logits.shape
    assert jnp.allclose(logits, ref_logits, atol=2e-3, rtol=2e-3)
    assert jnp.allclose(loss, ref_loss, atol=1e-3, rtol=1e-3)

    # ---- fast path: bf16 MXU inputs, f32 accumulation / softmax (loose check)
    prep_bf16 = prepare_params(params, use_bf16=True)
    out_bf = fwd(prep_bf16, text_input, img_input, img_labels, text_labels)
    logits_bf = jax.block_until_ready(out_bf["logits"])
    loss_bf = jax.block_until_ready(out_bf["loss_value"])
    assert jnp.all(jnp.isfinite(logits_bf)) and jnp.isfinite(loss_bf)
    assert jnp.allclose(logits_bf, ref_logits, atol=2.5e-1, rtol=5e-2)
    assert jnp.allclose(loss_bf, ref_loss, atol=1e-1, rtol=1e-1)

    print("KERNEL_OK")
</pallas_src>

<mosaic_0001>
module attributes {stable_mosaic.version = 11 : i64} {
  func.func @_fused_contrastive_kernel(%arg0: memref<1x1xf32, #tpu.memory_space<smem>>, %arg1: memref<8x1024xf32, #tpu.memory_space<vmem>>, %arg2: memref<1024x128xf32, #tpu.memory_space<vmem>>, %arg3: memref<1x128xf32, #tpu.memory_space<vmem>>, %arg4: memref<128x128xf32, #tpu.memory_space<vmem>>, %arg5: memref<128x128xf32, #tpu.memory_space<vmem>>, %arg6: memref<1x128xf32, #tpu.memory_space<vmem>>, %arg7: memref<8x128xf32, #tpu.memory_space<vmem>>, %arg8: memref<128x128xf32, #tpu.memory_space<vmem>>, %arg9: memref<8x128xf32, #tpu.memory_space<vmem>>, %arg10: memref<1x1xf32, #tpu.memory_space<smem>>) attributes {dimension_semantics = [], scalar_prefetch = 0 : i64, scratch_operands = 0 : i64, tpu.core_type = #tpu.core_type<tc>} {
    %c0 = arith.constant 0 : index
    %c0_0 = arith.constant 0 : index
    %0 = memref.load %arg0[%c0, %c0_0] : memref<1x1xf32, #tpu.memory_space<smem>>
    %c0_1 = arith.constant 0 : index
    %c0_2 = arith.constant 0 : index
    %1 = vector.load %arg1[%c0_1, %c0_2] : memref<8x1024xf32, #tpu.memory_space<vmem>>, vector<8x1024xf32>
    %c0_3 = arith.constant 0 : index
    %c0_4 = arith.constant 0 : index
    %2 = vector.load %arg2[%c0_3, %c0_4] : memref<1024x128xf32, #tpu.memory_space<vmem>>, vector<1024x128xf32>
    %cst = arith.constant dense<0.000000e+00> : vector<8x128xf32>
    %3 = tpu.matmul %1, %2, %cst {dimension_numbers = #tpu.dot_dimension_numbers<[1], [0], [0], [1], [0, 0, 1, 1], [], []>} : vector<8x1024xf32>, vector<1024x128xf32>, vector<8x128xf32> -> vector<8x128xf32>
    %c0_5 = arith.constant 0 : index
    %c0_6 = arith.constant 0 : index
    %4 = vector.load %arg3[%c0_5, %c0_6] : memref<1x128xf32, #tpu.memory_space<vmem>>, vector<1x128xf32>
    %5 = vector.broadcast %4 : vector<1x128xf32> to vector<8x128xf32>
    %6 = arith.addf %3, %5 : vector<8x128xf32>
    %c0_7 = arith.constant 0 : index
    %c0_8 = arith.constant 0 : index
    %7 = vector.load %arg4[%c0_7, %c0_8] : memref<128x128xf32, #tpu.memory_space<vmem>>, vector<128x128xf32>
    %c0_9 = arith.constant 0 : index
    %c0_10 = arith.constant 0 : index
    %8 = vector.load %arg5[%c0_9, %c0_10] : memref<128x128xf32, #tpu.memory_space<vmem>>, vector<128x128xf32>
    %cst_11 = arith.constant dense<0.000000e+00> : vector<128x128xf32>
    %9 = tpu.matmul %7, %8, %cst_11 {dimension_numbers = #tpu.dot_dimension_numbers<[1], [0], [0], [1], [0, 0, 1, 1], [], []>} : vector<128x128xf32>, vector<128x128xf32>, vector<128x128xf32> -> vector<128x128xf32>
    %c0_12 = arith.constant 0 : index
    %c0_13 = arith.constant 0 : index
    %10 = vector.load %arg6[%c0_12, %c0_13] : memref<1x128xf32, #tpu.memory_space<vmem>>, vector<1x128xf32>
    %11 = vector.broadcast %10 : vector<1x128xf32> to vector<128x128xf32>
    %12 = arith.addf %9, %11 : vector<128x128xf32>
    %13 = arith.mulf %6, %6 : vector<8x128xf32>
    %cst_14 = arith.constant dense<0.000000e+00> : vector<8xf32>
    %14 = vector.multi_reduction <add>, %13, %cst_14 [1] : vector<8x128xf32> to vector<8xf32>
    %15 = vector.shape_cast %14 : vector<8xf32> to vector<8x1xf32>
    %cst_15 = arith.constant 9.99999996E-13 : f32
    %16 = vector.broadcast %cst_15 : f32 to vector<8x1xf32>
    %17 = arith.maximumf %15, %16 : vector<8x1xf32>
    %18 = math.rsqrt %17 : vector<8x1xf32>
    %19 = vector.broadcast %18 : vector<8x1xf32> to vector<8x128xf32>
    %20 = arith.mulf %6, %19 : vector<8x128xf32>
    %21 = vector.broadcast %0 : f32 to vector<8x128xf32>
    %22 = arith.mulf %20, %21 : vector<8x128xf32>
    %23 = arith.mulf %12, %12 : vector<128x128xf32>
    %cst_16 = arith.constant dense<0.000000e+00> : vector<128xf32>
    %24 = vector.multi_reduction <add>, %23, %cst_16 [1] : vector<128x128xf32> to vector<128xf32>
    %25 = vector.shape_cast %24 : vector<128xf32> to vector<128x1xf32>
    %cst_17 = arith.constant 9.99999996E-13 : f32
    %26 = vector.broadcast %cst_17 : f32 to vector<128x1xf32>
    %27 = arith.maximumf %25, %26 : vector<128x1xf32>
    %28 = math.rsqrt %27 : vector<128x1xf32>
    %29 = vector.broadcast %28 : vector<128x1xf32> to vector<128x128xf32>
    %30 = arith.mulf %12, %29 : vector<128x128xf32>
    %cst_18 = arith.constant dense<0.000000e+00> : vector<8x128xf32>
    %31 = tpu.matmul %22, %30, %cst_18 {dimension_numbers = #tpu.dot_dimension_numbers<[1], [1], [0], [0], [0, 0, 1, 0], [], []>} : vector<8x128xf32>, vector<128x128xf32>, vector<8x128xf32> -> vector<8x128xf32>
    %c0_19 = arith.constant 0 : index
    %c0_20 = arith.constant 0 : index
    %32 = vector.load %arg7[%c0_19, %c0_20] : memref<8x128xf32, #tpu.memory_space<vmem>>, vector<8x128xf32>
    %c0_21 = arith.constant 0 : index
    %c0_22 = arith.constant 0 : index
    %33 = vector.load %arg8[%c0_21, %c0_22] : memref<128x128xf32, #tpu.memory_space<vmem>>, vector<128x128xf32>
    %cst_23 = arith.constant dense<0.000000e+00> : vector<8x128xf32>
    %34 = tpu.matmul %32, %33, %cst_23 {dimension_numbers = #tpu.dot_dimension_numbers<[1], [1], [0], [0], [0, 0, 1, 0], [], []>} : vector<8x128xf32>, vector<128x128xf32>, vector<8x128xf32> -> vector<8x128xf32>
    %c0_24 = arith.constant 0 : index
    %c0_25 = arith.constant 0 : index
    %35 = vector.load %arg9[%c0_24, %c0_25] : memref<8x128xf32, #tpu.memory_space<vmem>>, vector<8x128xf32>
    tpu.vector_store %arg9[%c0_24, %c0_25], %31 {strides = array<i32>} : memref<8x128xf32, #tpu.memory_space<vmem>>, vector<8x128xf32>,
    %36 = tpu.iota {dimensions = array<i32: 1>} : vector<1x128xi32>
    %c8_i32 = arith.constant 8 : i32
    %37 = vector.broadcast %c8_i32 : i32 to vector<1x128xi32>
    %38 = arith.cmpi slt, %36, %37 : vector<1x128xi32>
    %39 = tpu.iota {dimensions = array<i32: 0>} : vector<8x1xi32>
    %c8_i32_26 = arith.constant 8 : i32
    %40 = vector.broadcast %c8_i32_26 : i32 to vector<8x1xi32>
    %41 = arith.cmpi slt, %39, %40 : vector<8x1xi32>
    %cst_27 = arith.constant -1.000000e+30 : f32
    %42 = vector.shape_cast %38 : vector<1x128xi1> to vector<1x128xi1>
    %43 = vector.broadcast %42 : vector<1x128xi1> to vector<8x128xi1>
    %44 = vector.broadcast %cst_27 : f32 to vector<8x128xf32>
    %45 = arith.select %43, %31, %44 : vector<8x128xi1>, vector<8x128xf32>
    %cst_28 = arith.constant dense<0xFF800000> : vector<8xf32>
    %46 = vector.multi_reduction <maximumf>, %45, %cst_28 [1] : vector<8x128xf32> to vector<8xf32>
    %47 = vector.shape_cast %46 : vector<8xf32> to vector<8x1xf32>
    %48 = vector.broadcast %47 : vector<8x1xf32> to vector<8x128xf32>
    %49 = arith.subf %45, %48 : vector<8x128xf32>
    %50 = math.exp %49 : vector<8x128xf32>
    %cst_29 = arith.constant dense<0.000000e+00> : vector<8xf32>
    %51 = vector.multi_reduction <add>, %50, %cst_29 [1] : vector<8x128xf32> to vector<8xf32>
    %52 = vector.shape_cast %51 : vector<8xf32> to vector<8x1xf32>
    %53 = math.log %52 : vector<8x1xf32>
    %54 = vector.broadcast %53 : vector<8x1xf32> to vector<8x128xf32>
    %55 = arith.subf %49, %54 : vector<8x128xf32>
    %cst_30 = arith.constant -1.000000e+30 : f32
    %56 = vector.shape_cast %38 : vector<1x128xi1> to vector<1x128xi1>
    %57 = vector.broadcast %56 : vector<1x128xi1> to vector<8x128xi1>
    %58 = vector.broadcast %cst_30 : f32 to vector<8x128xf32>
    %59 = arith.select %57, %34, %58 : vector<8x128xi1>, vector<8x128xf32>
    %cst_31 = arith.constant dense<0xFF800000> : vector<8xf32>
    %60 = vector.multi_reduction <maximumf>, %59, %cst_31 [1] : vector<8x128xf32> to vector<8xf32>
    %61 = vector.shape_cast %60 : vector<8xf32> to vector<8x1xf32>
    %62 = vector.broadcast %61 : vector<8x1xf32> to vector<8x128xf32>
    %63 = arith.subf %59, %62 : vector<8x128xf32>
    %64 = math.exp %63 : vector<8x128xf32>
    %cst_32 = arith.constant dense<0.000000e+00> : vector<8xf32>
    %65 = vector.multi_reduction <add>, %64, %cst_32 [1] : vector<8x128xf32> to vector<8xf32>
    %66 = vector.shape_cast %65 : vector<8xf32> to vector<8x1xf32>
    %67 = math.log %66 : vector<8x1xf32>
    %68 = vector.broadcast %67 : vector<8x1xf32> to vector<8x128xf32>
    %69 = arith.subf %63, %68 : vector<8x128xf32>
    %70 = math.exp %69 : vector<8x128xf32>
    %71 = arith.mulf %70, %55 : vector<8x128xf32>
    %cst_33 = arith.constant 0.000000e+00 : f32
    %72 = vector.shape_cast %41 : vector<8x1xi1> to vector<8x1xi1>
    %73 = vector.broadcast %72 : vector<8x1xi1> to vector<8x128xi1>
    %74 = vector.broadcast %cst_33 : f32 to vector<8x128xf32>
    %75 = arith.select %73, %71, %74 : vector<8x128xi1>, vector<8x128xf32>
    %76 = vector.shape_cast %75 : vector<8x128xf32> to vector<1x8x128xf32>
    %cst_34 = arith.constant dense<0.000000e+00> : vector<1xf32>
    %77 = vector.multi_reduction <add>, %76, %cst_34 [1, 2] : vector<1x8x128xf32> to vector<1xf32>
    %78 = vector.shape_cast %77 : vector<1xf32> to vector<1x1x1xf32>
    %79 = vector.extract %78[0, 0, 0] : f32 from vector<1x1x1xf32>
    %cst_35 = arith.constant 0.000000e+00 : f32
    %80 = arith.subf %cst_35, %79 : f32
    %cst_36 = arith.constant 1.250000e-01 : f32
    %81 = arith.mulf %80, %cst_36 : f32
    %cst_37 = arith.constant -1.000000e+30 : f32
    %82 = vector.shape_cast %41 : vector<8x1xi1> to vector<8x1xi1>
    %83 = vector.broadcast %82 : vector<8x1xi1> to vector<8x128xi1>
    %84 = vector.broadcast %cst_37 : f32 to vector<8x128xf32>
    %85 = arith.select %83, %31, %84 : vector<8x128xi1>, vector<8x128xf32>
    %cst_38 = arith.constant dense<0xFF800000> : vector<128xf32>
    %86 = vector.multi_reduction <maximumf>, %85, %cst_38 [0] : vector<8x128xf32> to vector<128xf32>
    %87 = vector.shape_cast %86 : vector<128xf32> to vector<1x128xf32>
    %88 = vector.broadcast %87 : vector<1x128xf32> to vector<8x128xf32>
    %89 = arith.subf %85, %88 : vector<8x128xf32>
    %90 = math.exp %89 : vector<8x128xf32>
    %cst_39 = arith.constant dense<0.000000e+00> : vector<128xf32>
    %91 = vector.multi_reduction <add>, %90, %cst_39 [0] : vector<8x128xf32> to vector<128xf32>
    %92 = vector.shape_cast %91 : vector<128xf32> to vector<1x128xf32>
    %93 = math.log %92 : vector<1x128xf32>
    %94 = vector.broadcast %93 : vector<1x128xf32> to vector<8x128xf32>
    %95 = arith.subf %89, %94 : vector<8x128xf32>
    %cst_40 = arith.constant -1.000000e+30 : f32
    %96 = vector.shape_cast %41 : vector<8x1xi1> to vector<8x1xi1>
    %97 = vector.broadcast %96 : vector<8x1xi1> to vector<8x128xi1>
    %98 = vector.broadcast %cst_40 : f32 to vector<8x128xf32>
    %99 = arith.select %97, %34, %98 : vector<8x128xi1>, vector<8x128xf32>
    %cst_41 = arith.constant dense<0xFF800000> : vector<128xf32>
    %100 = vector.multi_reduction <maximumf>, %99, %cst_41 [0] : vector<8x128xf32> to vector<128xf32>
    %101 = vector.shape_cast %100 : vector<128xf32> to vector<1x128xf32>
    %102 = vector.broadcast %101 : vector<1x128xf32> to vector<8x128xf32>
    %103 = arith.subf %99, %102 : vector<8x128xf32>
    %104 = math.exp %103 : vector<8x128xf32>
    %cst_42 = arith.constant dense<0.000000e+00> : vector<128xf32>
    %105 = vector.multi_reduction <add>, %104, %cst_42 [0] : vector<8x128xf32> to vector<128xf32>
    %106 = vector.shape_cast %105 : vector<128xf32> to vector<1x128xf32>
    %107 = math.log %106 : vector<1x128xf32>
    %108 = vector.broadcast %107 : vector<1x128xf32> to vector<8x128xf32>
    %109 = arith.subf %103, %108 : vector<8x128xf32>
    %110 = math.exp %109 : vector<8x128xf32>
    %111 = arith.mulf %110, %95 : vector<8x128xf32>
    %cst_43 = arith.constant 0.000000e+00 : f32
    %112 = vector.shape_cast %38 : vector<1x128xi1> to vector<1x128xi1>
    %113 = vector.broadcast %112 : vector<1x128xi1> to vector<8x128xi1>
    %114 = vector.broadcast %cst_43 : f32 to vector<8x128xf32>
    %115 = arith.select %113, %111, %114 : vector<8x128xi1>, vector<8x128xf32>
    %116 = vector.shape_cast %115 : vector<8x128xf32> to vector<1x8x128xf32>
    %cst_44 = arith.constant dense<0.000000e+00> : vector<1xf32>
    %117 = vector.multi_reduction <add>, %116, %cst_44 [1, 2] : vector<1x8x128xf32> to vector<1xf32>
    %118 = vector.shape_cast %117 : vector<1xf32> to vector<1x1x1xf32>
    %119 = vector.extract %118[0, 0, 0] : f32 from vector<1x1x1xf32>
    %cst_45 = arith.constant 0.000000e+00 : f32
    %120 = arith.subf %cst_45, %119 : f32
    %cst_46 = arith.constant 1.250000e-01 : f32
    %121 = arith.mulf %120, %cst_46 : f32
    %122 = arith.addf %81, %121 : f32
    %cst_47 = arith.constant 5.000000e-01 : f32
    %123 = arith.mulf %122, %cst_47 : f32
    %c0_48 = arith.constant 0 : index
    %c0_49 = arith.constant 0 : index
    %124 = memref.load %arg10[%c0_48, %c0_49] : memref<1x1xf32, #tpu.memory_space<smem>>
    memref.store %123, %arg10[%c0_48, %c0_49] : memref<1x1xf32, #tpu.memory_space<smem>>
    return
  }
}

</mosaic_0001>

<llo_original>
// kernel: image_text_contrastive_loss_forward.1
$region0: #{image_text_contrastive_loss_forward.1}
  #allocation0 [shape = 'u32[]', space=smem, size = 0x4, offset = 0x4, fixed_abs, tag = 'smem constant byte address 0x4 - core index']
  #allocation1 [shape = 'u32[144,128]{1,0:T(1,128)}', space=vmem, size = 0x12000, scoped, tag = 'internal scratch']
  #allocation2 [shape = 'f32[1,1]{1,0:T(1,128)S(6)}', space=smem, size = 0x200, scoped, tag = 'scoped memory for image_text_contrastive_loss_forward.1']
  %s0 = inlined_call_operand.<no memory space> [shape: f32[1,1], index: 0, kind: input, shape index: {}]
  %s1 = inlined_call_operand.vmem [shape: f32[8,1024], index: 1, kind: input, shape index: {}]
  %s2 = inlined_call_operand.hbm [shape: f32[1024,128], index: 2, kind: input, shape index: {}]
  %s3 = inlined_call_operand.vmem [shape: f32[1,128], index: 3, kind: input, shape index: {}]
  %s4 = inlined_call_operand.vmem [shape: f32[128,128], index: 4, kind: input, shape index: {}]
  %s5 = inlined_call_operand.vmem [shape: f32[128,128], index: 5, kind: input, shape index: {}]
  %s6 = inlined_call_operand.vmem [shape: f32[1,128], index: 6, kind: input, shape index: {}]
  %s7 = inlined_call_operand.vmem [shape: f32[8,128], index: 7, kind: input, shape index: {}]
  %s8 = inlined_call_operand.vmem [shape: f32[128,128], index: 8, kind: input, shape index: {}]
  %s9 = inlined_call_operand.hbm [shape: f32[8,128], index: 9, kind: output, shape index: {0}]
  %s10 = inlined_call_operand.hbm [shape: f32[1,1], index: 10, kind: output, shape index: {1}]
  %11 = xla_tuple %s9, %s10
  %s12 = sld [smem:[#allocation0]]
  $region58: #{image_text_contrastive_loss_forward.1} parent=0
    _
  %s14 = ssub.s32 1, %s12
  %s15 = scalar_select 0, %s14, %s12
  %16 = sst [smem:[#allocation2]] %s0
  $region1: #{image_text_contrastive_loss_forward.1} parent=0
    #allocation3 [shape = 'u8[524288]{0}', space=vmem, size = 0x80000, scoped, tag = 'input window, operand 2, single buffered']
    #allocation4 [shape = 's32[1]{0}', space=sflag, size = 0x4, scoped, tag = 'scoped memory for image_text_contrastive_loss_forward.1']
    #allocation5 [shape = 's32[1]{0}', space=sflag, size = 0x4, scoped, tag = 'scoped memory for image_text_contrastive_loss_forward.1']
    #allocation6 [shape = 's32[1]{0}', space=sflag, size = 0x4, scoped, tag = 'scoped memory for image_text_contrastive_loss_forward.1']
    #allocation7 [shape = 'u8[4096]{0}', space=vmem, size = 0x1000, scoped, tag = 'output window, operand 0, single buffered']
    #allocation8 [shape = 'u8[512]{0}', space=smem, size = 0x200, scoped, tag = 'output window, operand 1, single buffered']
    %17 = vsyncpa [#allocation4], 0
    %18 = vsyncpa [#allocation5], 0
    %19 = vsyncpa [#allocation6], 0
    // Predicated region
    $region2: #{image_text_contrastive_loss_forward.1} parent=1 // pred_check
      _
    $region3: #{image_text_contrastive_loss_forward.1} parent=1 // pred_check_branch
      %21 = sbr.rel (0) target = $region5
    $region4: #{image_text_contrastive_loss_forward.1} parent=1 // pred_region
      _
    $region5: #{image_text_contrastive_loss_forward.1} parent=1 // pred_fallthru
      _
    // Predicated region
    $region6: #{image_text_contrastive_loss_forward.1} parent=1 // pred_check
      _
    $region7: #{image_text_contrastive_loss_forward.1} parent=1 // pred_check_branch
      %23 = sbr.rel (0) target = $region9
    $region8: #{image_text_contrastive_loss_forward.1} parent=1 // pred_region
      _
    $region9: #{image_text_contrastive_loss_forward.1} parent=1 // pred_fallthru
      _
    // Predicated region
    $region10: #{image_text_contrastive_loss_forward.1} parent=1 // pred_check
      _
    $region11: #{image_text_contrastive_loss_forward.1} parent=1 // pred_check_branch
      %25 = sbr.rel (0) target = $region13
    $region12: #{image_text_contrastive_loss_forward.1} parent=1 // pred_region
      %s27 = ssub.s32 16384, 16384
      %28 = vsyncadd [#allocation4], %s27
      %s29 = sshll.u32 [#allocation3], 4
      %s30 = int_to_ptr.vmem [resolvable:$true] %s29
      %35 = dma.hbm_to_vmem [thread:$0]  %s2, 16384, %s30, [#allocation4], 128, 128, 8
    $region13: #{image_text_contrastive_loss_forward.1} parent=1 // pred_fallthru
      _
    // Predicated region
    $region14: #{image_text_contrastive_loss_forward.1} parent=1 // pred_check
      _
    $region15: #{image_text_contrastive_loss_forward.1} parent=1 // pred_check_branch
      %37 = sbr.rel (0) target = $region17
    $region16: #{image_text_contrastive_loss_forward.1} parent=1 // pred_region
      _
    $region17: #{image_text_contrastive_loss_forward.1} parent=1 // pred_fallthru
      _
    // Predicated region
    $region18: #{image_text_contrastive_loss_forward.1} parent=1 // pred_check
      _
    $region19: #{image_text_contrastive_loss_forward.1} parent=1 // pred_check_branch
      %39 = sbr.rel (0) target = $region21
    $region20: #{image_text_contrastive_loss_forward.1} parent=1 // pred_region
      _
    $region21: #{image_text_contrastive_loss_forward.1} parent=1 // pred_fallthru
      _
    // Predicated region
    $region22: #{image_text_contrastive_loss_forward.1} parent=1 // pred_check
      _
    $region23: #{image_text_contrastive_loss_forward.1} parent=1 // pred_check_branch
      %41 = sbr.rel (0) target = $region25
    $region24: #{image_text_contrastive_loss_forward.1} parent=1 // pred_region
      _
    $region25: #{image_text_contrastive_loss_forward.1} parent=1 // pred_fallthru
      _
    // Predicated region
    $region26: #{image_text_contrastive_loss_forward.1} parent=1 // pred_check
      _
    $region27: #{image_text_contrastive_loss_forward.1} parent=1 // pred_check_branch
      %43 = sbr.rel (0) target = $region29
    $region28: #{image_text_contrastive_loss_forward.1} parent=1 // pred_region
      _
    $region29: #{image_text_contrastive_loss_forward.1} parent=1 // pred_fallthru
      _
    // Predicated region
    $region30: #{image_text_contrastive_loss_forward.1} parent=1 // pred_check
      _
    $region31: #{image_text_contrastive_loss_forward.1} parent=1 // pred_check_branch
      %45 = sbr.rel (0) target = $region33
    $region32: #{image_text_contrastive_loss_forward.1} parent=1 // pred_region
      _
    $region33: #{image_text_contrastive_loss_forward.1} parent=1 // pred_fallthru
      _
    // Predicated region
    $region34: #{image_text_contrastive_loss_forward.1} parent=1 // pred_check
      _
    $region35: #{image_text_contrastive_loss_forward.1} parent=1 // pred_check_branch
      %47 = sbr.rel (0) target = $region37
    $region36: #{image_text_contrastive_loss_forward.1} parent=1 // pred_region
      _
    $region37: #{image_text_contrastive_loss_forward.1} parent=1 // pred_fallthru
      _
    // Predicated region
    $region38: #{image_text_contrastive_loss_forward.1} parent=1 // pred_check
      _
    $region39: #{image_text_contrastive_loss_forward.1} parent=1 // pred_check_branch
      %49 = sbr.rel (0) target = $region41
    $region40: #{image_text_contrastive_loss_forward.1} parent=1 // pred_region
      %50 = dma.done [#allocation4], 16384
    $region41: #{image_text_contrastive_loss_forward.1} parent=1 // pred_fallthru
      _
    %s51 = sld [smem:[#allocation2]]
    %v52 = vld [vmem:[%s1] sm:$0xff]
    %v53 = vld [vmem:[%s1 + $0x8] sm:$0xff]
    %v54 = vld [vmem:[%s1 + $0x10] sm:$0xff]
    %v55 = vld [vmem:[%s1 + $0x18] sm:$0xff]
    %v56 = vld [vmem:[%s1 + $0x20] sm:$0xff]
    %v57 = vld [vmem:[%s1 + $0x28] sm:$0xff]
    %v58 = vld [vmem:[%s1 + $0x30] sm:$0xff]
    %v59 = vld [vmem:[%s1 + $0x38] sm:$0xff]
    %v60 = vld [vmem:[#allocation3] sm:$0xff]
    %v61 = vld [vmem:[#allocation3 + $0x8] sm:$0xff]
    %v62 = vld [vmem:[#allocation3 + $0x10] sm:$0xff]
    %v63 = vld [vmem:[#allocation3 + $0x18] sm:$0xff]
    %v64 = vld [vmem:[#allocation3 + $0x20] sm:$0xff]
    %v65 = vld [vmem:[#allocation3 + $0x28] sm:$0xff]
    %v66 = vld [vmem:[#allocation3 + $0x30] sm:$0xff]
    %v67 = vld [vmem:[#allocation3 + $0x38] sm:$0xff]
    %v68 = vld [vmem:[#allocation3 + $0x40] sm:$0xff]
    %v69 = vld [vmem:[#allocation3 + $0x48] sm:$0xff]
    %v70 = vld [vmem:[#allocation3 + $0x50] sm:$0xff]
    %v71 = vld [vmem:[#allocation3 + $0x58] sm:$0xff]
    %v72 = vld [vmem:[#allocation3 + $0x60] sm:$0xff]
    %v73 = vld [vmem:[#allocation3 + $0x68] sm:$0xff]
    %v74 = vld [vmem:[#allocation3 + $0x70] sm:$0xff]
    %v75 = vld [vmem:[#allocation3 + $0x78] sm:$0xff]
    %v76 = vld [vmem:[#allocation3 + $0x80] sm:$0xff]
    %v77 = vld [vmem:[#allocation3 + $0x88] sm:$0xff]
    %v78 = vld [vmem:[#allocation3 + $0x90] sm:$0xff]
    %v79 = vld [vmem:[#allocation3 + $0x98] sm:$0xff]
    %v80 = vld [vmem:[#allocation3 + $0xa0] sm:$0xff]
    %v81 = vld [vmem:[#allocation3 + $0xa8] sm:$0xff]
    %v82 = vld [vmem:[#allocation3 + $0xb0] sm:$0xff]
    %v83 = vld [vmem:[#allocation3 + $0xb8] sm:$0xff]
    %v84 = vld [vmem:[#allocation3 + $0xc0] sm:$0xff]
    %v85 = vld [vmem:[#allocation3 + $0xc8] sm:$0xff]
    %v86 = vld [vmem:[#allocation3 + $0xd0] sm:$0xff]
    %v87 = vld [vmem:[#allocation3 + $0xd8] sm:$0xff]
    %v88 = vld [vmem:[#allocation3 + $0xe0] sm:$0xff]
    %v89 = vld [vmem:[#allocation3 + $0xe8] sm:$0xff]
    %v90 = vld [vmem:[#allocation3 + $0xf0] sm:$0xff]
    %v91 = vld [vmem:[#allocation3 + $0xf8] sm:$0xff]
    %v92 = vld [vmem:[#allocation3 + $0x100] sm:$0xff]
    %v93 = vld [vmem:[#allocation3 + $0x108] sm:$0xff]
    %v94 = vld [vmem:[#allocation3 + $0x110] sm:$0xff]
    %v95 = vld [vmem:[#allocation3 + $0x118] sm:$0xff]
    %v96 = vld [vmem:[#allocation3 + $0x120] sm:$0xff]
    %v97 = vld [vmem:[#allocation3 + $0x128] sm:$0xff]
    %v98 = vld [vmem:[#allocation3 + $0x130] sm:$0xff]
    %v99 = vld [vmem:[#allocation3 + $0x138] sm:$0xff]
    %v100 = vld [vmem:[#allocation3 + $0x140] sm:$0xff]
    %v101 = vld [vmem:[#allocation3 + $0x148] sm:$0xff]
    %v102 = vld [vmem:[#allocation3 + $0x150] sm:$0xff]
    %v103 = vld [vmem:[#allocation3 + $0x158] sm:$0xff]
    %v104 = vld [vmem:[#allocation3 + $0x160] sm:$0xff]
    %v105 = vld [vmem:[#allocation3 + $0x168] sm:$0xff]
    %v106 = vld [vmem:[#allocation3 + $0x170] sm:$0xff]
    %v107 = vld [vmem:[#allocation3 + $0x178] sm:$0xff]
    %v108 = vld [vmem:[#allocation3 + $0x180] sm:$0xff]
    %v109 = vld [vmem:[#allocation3 + $0x188] sm:$0xff]
    %v110 = vld [vmem:[#allocation3 + $0x190] sm:$0xff]
    %v111 = vld [vmem:[#allocation3 + $0x198] sm:$0xff]
    %v112 = vld [vmem:[#allocation3 + $0x1a0] sm:$0xff]
    %v113 = vld [vmem:[#allocation3 + $0x1a8] sm:$0xff]
    %v114 = vld [vmem:[#allocation3 + $0x1b0] sm:$0xff]
    %v115 = vld [vmem:[#allocation3 + $0x1b8] sm:$0xff]
    %v116 = vld [vmem:[#allocation3 + $0x1c0] sm:$0xff]
    %v117 = vld [vmem:[#allocation3 + $0x1c8] sm:$0xff]
    %v118 = vld [vmem:[#allocation3 + $0x1d0] sm:$0xff]
    %v119 = vld [vmem:[#allocation3 + $0x1d8] sm:$0xff]
    %v120 = vld [vmem:[#allocation3 + $0x1e0] sm:$0xff]
    %v121 = vld [vmem:[#allocation3 + $0x1e8] sm:$0xff]
    %v122 = vld [vmem:[#allocation3 + $0x1f0] sm:$0xff]
    %v123 = vld [vmem:[#allocation3 + $0x1f8] sm:$0xff]
    %v124 = vld [vmem:[#allocation3 + $0x200] sm:$0xff]
    %v125 = vld [vmem:[#allocation3 + $0x208] sm:$0xff]
    %v126 = vld [vmem:[#allocation3 + $0x210] sm:$0xff]
    %v127 = vld [vmem:[#allocation3 + $0x218] sm:$0xff]
    %v128 = vld [vmem:[#allocation3 + $0x220] sm:$0xff]
    %v129 = vld [vmem:[#allocation3 + $0x228] sm:$0xff]
    %v130 = vld [vmem:[#allocation3 + $0x230] sm:$0xff]
    %v131 = vld [vmem:[#allocation3 + $0x238] sm:$0xff]
    %v132 = vld [vmem:[#allocation3 + $0x240] sm:$0xff]
    %v133 = vld [vmem:[#allocation3 + $0x248] sm:$0xff]
    %v134 = vld [vmem:[#allocation3 + $0x250] sm:$0xff]
    %v135 = vld [vmem:[#allocation3 + $0x258] sm:$0xff]
    %v136 = vld [vmem:[#allocation3 + $0x260] sm:$0xff]
    %v137 = vld [vmem:[#allocation3 + $0x268] sm:$0xff]
    %v138 = vld [vmem:[#allocation3 + $0x270] sm:$0xff]
    %v139 = vld [vmem:[#allocation3 + $0x278] sm:$0xff]
    %v140 = vld [vmem:[#allocation3 + $0x280] sm:$0xff]
    %v141 = vld [vmem:[#allocation3 + $0x288] sm:$0xff]
    %v142 = vld [vmem:[#allocation3 + $0x290] sm:$0xff]
    %v143 = vld [vmem:[#allocation3 + $0x298] sm:$0xff]
    %v144 = vld [vmem:[#allocation3 + $0x2a0] sm:$0xff]
    %v145 = vld [vmem:[#allocation3 + $0x2a8] sm:$0xff]
    %v146 = vld [vmem:[#allocation3 + $0x2b0] sm:$0xff]
    %v147 = vld [vmem:[#allocation3 + $0x2b8] sm:$0xff]
    %v148 = vld [vmem:[#allocation3 + $0x2c0] sm:$0xff]
    %v149 = vld [vmem:[#allocation3 + $0x2c8] sm:$0xff]
    %v150 = vld [vmem:[#allocation3 + $0x2d0] sm:$0xff]
    %v151 = vld [vmem:[#allocation3 + $0x2d8] sm:$0xff]
    %v152 = vld [vmem:[#allocation3 + $0x2e0] sm:$0xff]
    %v153 = vld [vmem:[#allocation3 + $0x2e8] sm:$0xff]
    %v154 = vld [vmem:[#allocation3 + $0x2f0] sm:$0xff]
    %v155 = vld [vmem:[#allocation3 + $0x2f8] sm:$0xff]
    %v156 = vld [vmem:[#allocation3 + $0x300] sm:$0xff]
    %v157 = vld [vmem:[#allocation3 + $0x308] sm:$0xff]
    %v158 = vld [vmem:[#allocation3 + $0x310] sm:$0xff]
    %v159 = vld [vmem:[#allocation3 + $0x318] sm:$0xff]
    %v160 = vld [vmem:[#allocation3 + $0x320] sm:$0xff]
    %v161 = vld [vmem:[#allocation3 + $0x328] sm:$0xff]
    %v162 = vld [vmem:[#allocation3 + $0x330] sm:$0xff]
    %v163 = vld [vmem:[#allocation3 + $0x338] sm:$0xff]
    %v164 = vld [vmem:[#allocation3 + $0x340] sm:$0xff]
    %v165 = vld [vmem:[#allocation3 + $0x348] sm:$0xff]
    %v166 = vld [vmem:[#allocation3 + $0x350] sm:$0xff]
    %v167 = vld [vmem:[#allocation3 + $0x358] sm:$0xff]
    %v168 = vld [vmem:[#allocation3 + $0x360] sm:$0xff]
    %v169 = vld [vmem:[#allocation3 + $0x368] sm:$0xff]
    %v170 = vld [vmem:[#allocation3 + $0x370] sm:$0xff]
    %v171 = vld [vmem:[#allocation3 + $0x378] sm:$0xff]
    %v172 = vld [vmem:[#allocation3 + $0x380] sm:$0xff]
    %v173 = vld [vmem:[#allocation3 + $0x388] sm:$0xff]
    %v174 = vld [vmem:[#allocation3 + $0x390] sm:$0xff]
    %v175 = vld [vmem:[#allocation3 + $0x398] sm:$0xff]
    %v176 = vld [vmem:[#allocation3 + $0x3a0] sm:$0xff]
    %v177 = vld [vmem:[#allocation3 + $0x3a8] sm:$0xff]
    %v178 = vld [vmem:[#allocation3 + $0x3b0] sm:$0xff]
    %v179 = vld [vmem:[#allocation3 + $0x3b8] sm:$0xff]
    %v180 = vld [vmem:[#allocation3 + $0x3c0] sm:$0xff]
    %v181 = vld [vmem:[#allocation3 + $0x3c8] sm:$0xff]
    %v182 = vld [vmem:[#allocation3 + $0x3d0] sm:$0xff]
    %v183 = vld [vmem:[#allocation3 + $0x3d8] sm:$0xff]
    %v184 = vld [vmem:[#allocation3 + $0x3e0] sm:$0xff]
    %v185 = vld [vmem:[#allocation3 + $0x3e8] sm:$0xff]
    %v186 = vld [vmem:[#allocation3 + $0x3f0] sm:$0xff]
    %v187 = vld [vmem:[#allocation3 + $0x3f8] sm:$0xff]
    %v188 = vld [vmem:[%s3] sm:$0x1]
    %v190 = vlaneseq
    %v191 = vshrl.u32 %v190, 7
    %v192 = vsub.s32 0, %v191
    %v193 = vrot.slane %v188, %v192
    %195 = vmatprep.subr.mxu0 0.0
    %196 = vmatpush1.msra.mxu0 %v60
    %197 = vmatprep.subr.mxu0 0.0
    %198 = vmatpush1.msra.mxu0 %v61
    %199 = vmatprep.subr.mxu0 0.0
    %200 = vmatpush1.msra.mxu0 %v62
    %201 = vmatprep.subr.mxu0 0.0
    %202 = vmatpush1.msra.mxu0 %v63
    %203 = vmatprep.subr.mxu0 0.0
    %204 = vmatpush1.msra.mxu0 %v64
    %205 = vmatprep.subr.mxu0 0.0
    %206 = vmatpush1.msra.mxu0 %v65
    %207 = vmatprep.subr.mxu0 0.0
    %208 = vmatpush1.msra.mxu0 %v66
    %209 = vmatprep.subr.mxu0 0.0
    %210 = vmatpush1.msra.mxu0 %v67
    %211 = vmatprep.subr.mxu0 0.0
    %212 = vmatpush1.msra.mxu0 %v68
    %213 = vmatprep.subr.mxu0 0.0
    %214 = vmatpush1.msra.mxu0 %v69
    %215 = vmatprep.subr.mxu0 0.0
    %216 = vmatpush1.msra.mxu0 %v70
    %217 = vmatprep.subr.mxu0 0.0
    %218 = vmatpush1.msra.mxu0 %v71
    %219 = vmatprep.subr.mxu0 0.0
    %220 = vmatpush1.msra.mxu0 %v72
    %221 = vmatprep.subr.mxu0 0.0
    %222 = vmatpush1.msra.mxu0 %v73
    %223 = vmatprep.subr.mxu0 0.0
    %224 = vmatpush1.msra.mxu0 %v74
    %225 = vmatprep.subr.mxu0 0.0
    %226 = vmatpush1.msra.mxu0 %v75
    %227 = vmatprep.subr.mxu0 0.0
    %228 = vmatpush1.msra.mxu0 %v76
    %229 = vmatprep.subr.mxu0 0.0
    %230 = vmatpush1.msra.mxu0 %v77
    %231 = vmatprep.subr.mxu0 0.0
    %232 = vmatpush1.msra.mxu0 %v78
    %233 = vmatprep.subr.mxu0 0.0
    %234 = vmatpush1.msra.mxu0 %v79
    %235 = vmatprep.subr.mxu0 0.0
    %236 = vmatpush1.msra.mxu0 %v80
    %237 = vmatprep.subr.mxu0 0.0
    %238 = vmatpush1.msra.mxu0 %v81
    %239 = vmatprep.subr.mxu0 0.0
    %240 = vmatpush1.msra.mxu0 %v82
    %241 = vmatprep.subr.mxu0 0.0
    %242 = vmatpush1.msra.mxu0 %v83
    %243 = vmatprep.subr.mxu0 0.0
    %244 = vmatpush1.msra.mxu0 %v84
    %245 = vmatprep.subr.mxu0 0.0
    %246 = vmatpush1.msra.mxu0 %v85
    %247 = vmatprep.subr.mxu0 0.0
    %248 = vmatpush1.msra.mxu0 %v86
    %249 = vmatprep.subr.mxu0 0.0
    %250 = vmatpush1.msra.mxu0 %v87
    %251 = vmatprep.subr.mxu0 0.0
    %252 = vmatpush1.msra.mxu0 %v88
    %253 = vmatprep.subr.mxu0 0.0
    %254 = vmatpush1.msra.mxu0 %v89
    %255 = vmatprep.subr.mxu0 0.0
    %256 = vmatpush1.msra.mxu0 %v90
    %257 = vmatprep.subr.mxu0 0.0
    %258 = vmatpush1.msra.mxu0 %v91
    %259 = vmatprep.mubr.f32.mxu0 %v53
    %260 = vmatmul.mubr.f32.gmra.mrb[0].mxu0 %v52
    %v261 = vpop.f32.mrb[0].mxu0
    %v262 = vadd.f32 %v193, %v261
    %v263 = vpop.f32.mrb[0].mxu0
    %264 = vdwg.mxu0
    %265 = vmatprep.subr.mxu0 0.0
    %266 = vmatpush1.msra.mxu0 %v92
    %267 = vmatprep.subr.mxu0 0.0
    %268 = vmatpush1.msra.mxu0 %v93
    %269 = vmatprep.subr.mxu0 0.0
    %270 = vmatpush1.msra.mxu0 %v94
    %271 = vmatprep.subr.mxu0 0.0
    %272 = vmatpush1.msra.mxu0 %v95
    %273 = vmatprep.subr.mxu0 0.0
    %274 = vmatpush1.msra.mxu0 %v96
    %275 = vmatprep.subr.mxu0 0.0
    %276 = vmatpush1.msra.mxu0 %v97
    %277 = vmatprep.subr.mxu0 0.0
    %278 = vmatpush1.msra.mxu0 %v98
    %279 = vmatprep.subr.mxu0 0.0
    %280 = vmatpush1.msra.mxu0 %v99
    %281 = vmatprep.subr.mxu0 0.0
    %282 = vmatpush1.msra.mxu0 %v100
    %283 = vmatprep.subr.mxu0 0.0
    %284 = vmatpush1.msra.mxu0 %v101
    %285 = vmatprep.subr.mxu0 0.0
    %286 = vmatpush1.msra.mxu0 %v102
    %287 = vmatprep.subr.mxu0 0.0
    %288 = vmatpush1.msra.mxu0 %v103
    %289 = vmatprep.subr.mxu0 0.0
    %290 = vmatpush1.msra.mxu0 %v104
    %291 = vmatprep.subr.mxu0 0.0
    %292 = vmatpush1.msra.mxu0 %v105
    %293 = vmatprep.subr.mxu0 0.0
    %294 = vmatpush1.msra.mxu0 %v106
    %295 = vmatprep.subr.mxu0 0.0
    %296 = vmatpush1.msra.mxu0 %v107
    %297 = vmatprep.subr.mxu0 0.0
    %298 = vmatpush1.msra.mxu0 %v108
    %299 = vmatprep.subr.mxu0 0.0
    %300 = vmatpush1.msra.mxu0 %v109
    %301 = vmatprep.subr.mxu0 0.0
    %302 = vmatpush1.msra.mxu0 %v110
    %303 = vmatprep.subr.mxu0 0.0
    %304 = vmatpush1.msra.mxu0 %v111
    %305 = vmatprep.subr.mxu0 0.0
    %306 = vmatpush1.msra.mxu0 %v112
    %307 = vmatprep.subr.mxu0 0.0
    %308 = vmatpush1.msra.mxu0 %v113
    %309 = vmatprep.subr.mxu0 0.0
    %310 = vmatpush1.msra.mxu0 %v114
    %311 = vmatprep.subr.mxu0 0.0
    %312 = vmatpush1.msra.mxu0 %v115
    %313 = vmatprep.subr.mxu0 0.0
    %314 = vmatpush1.msra.mxu0 %v116
    %315 = vmatprep.subr.mxu0 0.0
    %316 = vmatpush1.msra.mxu0 %v117
    %317 = vmatprep.subr.mxu0 0.0
    %318 = vmatpush1.msra.mxu0 %v118
    %319 = vmatprep.subr.mxu0 0.0
    %320 = vmatpush1.msra.mxu0 %v119
    %321 = vmatprep.subr.mxu0 0.0
    %322 = vmatpush1.msra.mxu0 %v120
    %323 = vmatprep.subr.mxu0 0.0
    %324 = vmatpush1.msra.mxu0 %v121
    %325 = vmatprep.subr.mxu0 0.0
    %326 = vmatpush1.msra.mxu0 %v122
    %327 = vmatprep.subr.mxu0 0.0
    %328 = vmatpush1.msra.mxu0 %v123
    %329 = vmatprep.mubr.f32.mxu0 %v55
    %330 = vmatmul.mubr.f32.gmra.mrb[0].mxu0 %v54
    %v331 = vpop.f32.mrb[0].mxu0
    %v332 = vadd.f32 %v262, %v331
    %v333 = vpop.f32.mrb[0].mxu0
    %334 = vdwg.mxu0
    %335 = vmatprep.subr.mxu0 0.0
    %336 = vmatpush1.msra.mxu0 %v124
    %337 = vmatprep.subr.mxu0 0.0
    %338 = vmatpush1.msra.mxu0 %v125
    %339 = vmatprep.subr.mxu0 0.0
    %340 = vmatpush1.msra.mxu0 %v126
    %341 = vmatprep.subr.mxu0 0.0
    %342 = vmatpush1.msra.mxu0 %v127
    %343 = vmatprep.subr.mxu0 0.0
    %344 = vmatpush1.msra.mxu0 %v128
    %345 = vmatprep.subr.mxu0 0.0
    %346 = vmatpush1.msra.mxu0 %v129
    %347 = vmatprep.subr.mxu0 0.0
    %348 = vmatpush1.msra.mxu0 %v130
    %349 = vmatprep.subr.mxu0 0.0
    %350 = vmatpush1.msra.mxu0 %v131
    %351 = vmatprep.subr.mxu0 0.0
    %352 = vmatpush1.msra.mxu0 %v132
    %353 = vmatprep.subr.mxu0 0.0
    %354 = vmatpush1.msra.mxu0 %v133
    %355 = vmatprep.subr.mxu0 0.0
    %356 = vmatpush1.msra.mxu0 %v134
    %357 = vmatprep.subr.mxu0 0.0
    %358 = vmatpush1.msra.mxu0 %v135
    %359 = vmatprep.subr.mxu0 0.0
    %360 = vmatpush1.msra.mxu0 %v136
    %361 = vmatprep.subr.mxu0 0.0
    %362 = vmatpush1.msra.mxu0 %v137
    %363 = vmatprep.subr.mxu0 0.0
    %364 = vmatpush1.msra.mxu0 %v138
    %365 = vmatprep.subr.mxu0 0.0
    %366 = vmatpush1.msra.mxu0 %v139
    %367 = vmatprep.subr.mxu0 0.0
    %368 = vmatpush1.msra.mxu0 %v140
    %369 = vmatprep.subr.mxu0 0.0
    %370 = vmatpush1.msra.mxu0 %v141
    %371 = vmatprep.subr.mxu0 0.0
    %372 = vmatpush1.msra.mxu0 %v142
    %373 = vmatprep.subr.mxu0 0.0
    %374 = vmatpush1.msra.mxu0 %v143
    %375 = vmatprep.subr.mxu0 0.0
    %376 = vmatpush1.msra.mxu0 %v144
    %377 = vmatprep.subr.mxu0 0.0
    %378 = vmatpush1.msra.mxu0 %v145
    %379 = vmatprep.subr.mxu0 0.0
    %380 = vmatpush1.msra.mxu0 %v146
    %381 = vmatprep.subr.mxu0 0.0
    %382 = vmatpush1.msra.mxu0 %v147
    %383 = vmatprep.subr.mxu0 0.0
    %384 = vmatpush1.msra.mxu0 %v148
    %385 = vmatprep.subr.mxu0 0.0
    %386 = vmatpush1.msra.mxu0 %v149
    %387 = vmatprep.subr.mxu0 0.0
    %388 = vmatpush1.msra.mxu0 %v150
    %389 = vmatprep.subr.mxu0 0.0
    %390 = vmatpush1.msra.mxu0 %v151
    %391 = vmatprep.subr.mxu0 0.0
    %392 = vmatpush1.msra.mxu0 %v152
    %393 = vmatprep.subr.mxu0 0.0
    %394 = vmatpush1.msra.mxu0 %v153
    %395 = vmatprep.subr.mxu0 0.0
    %396 = vmatpush1.msra.mxu0 %v154
    %397 = vmatprep.subr.mxu0 0.0
    %398 = vmatpush1.msra.mxu0 %v155
    %399 = vmatprep.mubr.f32.mxu0 %v57
    %400 = vmatmul.mubr.f32.gmra.mrb[0].mxu0 %v56
    %v401 = vpop.f32.mrb[0].mxu0
    %v402 = vadd.f32 %v332, %v401
    %v403 = vpop.f32.mrb[0].mxu0
    %404 = vdwg.mxu0
    %405 = vmatprep.subr.mxu0 0.0
    %406 = vmatpush1.msra.mxu0 %v156
    %407 = vmatprep.subr.mxu0 0.0
    %408 = vmatpush1.msra.mxu0 %v157
    %409 = vmatprep.subr.mxu0 0.0
    %410 = vmatpush1.msra.mxu0 %v158
    %411 = vmatprep.subr.mxu0 0.0
    %412 = vmatpush1.msra.mxu0 %v159
    %413 = vmatprep.subr.mxu0 0.0
    %414 = vmatpush1.msra.mxu0 %v160
    %415 = vmatprep.subr.mxu0 0.0
    %416 = vmatpush1.msra.mxu0 %v161
    %417 = vmatprep.subr.mxu0 0.0
    %418 = vmatpush1.msra.mxu0 %v162
    %419 = vmatprep.subr.mxu0 0.0
    %420 = vmatpush1.msra.mxu0 %v163
    %421 = vmatprep.subr.mxu0 0.0
    %422 = vmatpush1.msra.mxu0 %v164
    %423 = vmatprep.subr.mxu0 0.0
    %424 = vmatpush1.msra.mxu0 %v165
    %425 = vmatprep.subr.mxu0 0.0
    %426 = vmatpush1.msra.mxu0 %v166
    %427 = vmatprep.subr.mxu0 0.0
    %428 = vmatpush1.msra.mxu0 %v167
    %429 = vmatprep.subr.mxu0 0.0
    %430 = vmatpush1.msra.mxu0 %v168
    %431 = vmatprep.subr.mxu0 0.0
    %432 = vmatpush1.msra.mxu0 %v169
    %433 = vmatprep.subr.mxu0 0.0
    %434 = vmatpush1.msra.mxu0 %v170
    %435 = vmatprep.subr.mxu0 0.0
    %436 = vmatpush1.msra.mxu0 %v171
    %437 = vmatprep.subr.mxu0 0.0
    %438 = vmatpush1.msra.mxu0 %v172
    %439 = vmatprep.subr.mxu0 0.0
    %440 = vmatpush1.msra.mxu0 %v173
    %441 = vmatprep.subr.mxu0 0.0
    %442 = vmatpush1.msra.mxu0 %v174
    %443 = vmatprep.subr.mxu0 0.0
    %444 = vmatpush1.msra.mxu0 %v175
    %445 = vmatprep.subr.mxu0 0.0
    %446 = vmatpush1.msra.mxu0 %v176
    %447 = vmatprep.subr.mxu0 0.0
    %448 = vmatpush1.msra.mxu0 %v177
    %449 = vmatprep.subr.mxu0 0.0
    %450 = vmatpush1.msra.mxu0 %v178
    %451 = vmatprep.subr.mxu0 0.0
    %452 = vmatpush1.msra.mxu0 %v179
    %453 = vmatprep.subr.mxu0 0.0
    %454 = vmatpush1.msra.mxu0 %v180
    %455 = vmatprep.subr.mxu0 0.0
    %456 = vmatpush1.msra.mxu0 %v181
    %457 = vmatprep.subr.mxu0 0.0
    %458 = vmatpush1.msra.mxu0 %v182
    %459 = vmatprep.subr.mxu0 0.0
    %460 = vmatpush1.msra.mxu0 %v183
    %461 = vmatprep.subr.mxu0 0.0
    %462 = vmatpush1.msra.mxu0 %v184
    %463 = vmatprep.subr.mxu0 0.0
    %464 = vmatpush1.msra.mxu0 %v185
    %465 = vmatprep.subr.mxu0 0.0
    %466 = vmatpush1.msra.mxu0 %v186
    %467 = vmatprep.subr.mxu0 0.0
    %468 = vmatpush1.msra.mxu0 %v187
    %469 = vmatprep.mubr.f32.mxu0 %v59
    %470 = vmatmul.mubr.f32.gmra.mrb[0].mxu0 %v58
    %v471 = vpop.f32.mrb[0].mxu0
    %v472 = vadd.f32 %v402, %v471
    %v473 = vpop.f32.mrb[0].mxu0
    %474 = vdwg.mxu0
    %v475 = vld [vmem:[%s4] sm:$0xff]
    %v476 = vld [vmem:[%s4 + $0x8] sm:$0xff]
    %v477 = vld [vmem:[%s4 + $0x10] sm:$0xff]
    %v478 = vld [vmem:[%s4 + $0x18] sm:$0xff]
    %v479 = vld [vmem:[%s4 + $0x20] sm:$0xff]
    %v480 = vld [vmem:[%s4 + $0x28] sm:$0xff]
    %v481 = vld [vmem:[%s4 + $0x30] sm:$0xff]
    %v482 = vld [vmem:[%s4 + $0x38] sm:$0xff]
    %v483 = vld [vmem:[%s4 + $0x40] sm:$0xff]
    %v484 = vld [vmem:[%s4 + $0x48] sm:$0xff]
    %v485 = vld [vmem:[%s4 + $0x50] sm:$0xff]
    %v486 = vld [vmem:[%s4 + $0x58] sm:$0xff]
    %v487 = vld [vmem:[%s4 + $0x60] sm:$0xff]
    %v488 = vld [vmem:[%s4 + $0x68] sm:$0xff]
    %v489 = vld [vmem:[%s4 + $0x70] sm:$0xff]
    %v490 = vld [vmem:[%s4 + $0x78] sm:$0xff]
    %v491 = vld [vmem:[%s5] sm:$0xff]
    %v492 = vld [vmem:[%s5 + $0x8] sm:$0xff]
    %v493 = vld [vmem:[%s5 + $0x10] sm:$0xff]
    %v494 = vld [vmem:[%s5 + $0x18] sm:$0xff]
    %v495 = vld [vmem:[%s5 + $0x20] sm:$0xff]
    %v496 = vld [vmem:[%s5 + $0x28] sm:$0xff]
    %v497 = vld [vmem:[%s5 + $0x30] sm:$0xff]
    %v498 = vld [vmem:[%s5 + $0x38] sm:$0xff]
    %v499 = vld [vmem:[%s5 + $0x40] sm:$0xff]
    %v500 = vld [vmem:[%s5 + $0x48] sm:$0xff]
    %v501 = vld [vmem:[%s5 + $0x50] sm:$0xff]
    %v502 = vld [vmem:[%s5 + $0x58] sm:$0xff]
    %v503 = vld [vmem:[%s5 + $0x60] sm:$0xff]
    %v504 = vld [vmem:[%s5 + $0x68] sm:$0xff]
    %v505 = vld [vmem:[%s5 + $0x70] sm:$0xff]
    %v506 = vld [vmem:[%s5 + $0x78] sm:$0xff]
    %v507 = vld [vmem:[%s6] sm:$0x1]
    %v509 = vlaneseq
    %v510 = vshrl.u32 %v509, 7
    %v511 = vsub.s32 0, %v510
    %v512 = vrot.slane %v507, %v511
    %514 = vmatprep.subr.mxu0 0.0
    %515 = vmatpush1.msra.mxu0 %v491
    %516 = vmatprep.subr.mxu0 0.0
    %517 = vmatpush1.msra.mxu0 %v492
    %518 = vmatprep.subr.mxu0 0.0
    %519 = vmatpush1.msra.mxu0 %v493
    %520 = vmatprep.subr.mxu0 0.0
    %521 = vmatpush1.msra.mxu0 %v494
    %522 = vmatprep.subr.mxu0 0.0
    %523 = vmatpush1.msra.mxu0 %v495
    %524 = vmatprep.subr.mxu0 0.0
    %525 = vmatpush1.msra.mxu0 %v496
    %526 = vmatprep.subr.mxu0 0.0
    %527 = vmatpush1.msra.mxu0 %v497
    %528 = vmatprep.subr.mxu0 0.0
    %529 = vmatpush1.msra.mxu0 %v498
    %530 = vmatprep.subr.mxu0 0.0
    %531 = vmatpush1.msra.mxu0 %v499
    %532 = vmatprep.subr.mxu0 0.0
    %533 = vmatpush1.msra.mxu0 %v500
    %534 = vmatprep.subr.mxu0 0.0
    %535 = vmatpush1.msra.mxu0 %v501
    %536 = vmatprep.subr.mxu0 0.0
    %537 = vmatpush1.msra.mxu0 %v502
    %538 = vmatprep.subr.mxu0 0.0
    %539 = vmatpush1.msra.mxu0 %v503
    %540 = vmatprep.subr.mxu0 0.0
    %541 = vmatpush1.msra.mxu0 %v504
    %542 = vmatprep.subr.mxu0 0.0
    %543 = vmatpush1.msra.mxu0 %v505
    %544 = vmatprep.subr.mxu0 0.0
    %545 = vmatpush1.msra.mxu0 %v506
    %546 = vmatprep.subr.mxu0 0.0
    %547 = vmatpush1.msra.mxu0 0.0
    %548 = vmatprep.subr.mxu0 0.0
    %549 = vmatpush1.msra.mxu0 0.0
    %550 = vmatprep.subr.mxu0 0.0
    %551 = vmatpush1.msra.mxu0 0.0
    %552 = vmatprep.subr.mxu0 0.0
    %553 = vmatpush1.msra.mxu0 0.0
    %554 = vmatprep.subr.mxu0 0.0
    %555 = vmatpush1.msra.mxu0 0.0
    %556 = vmatprep.subr.mxu0 0.0
    %557 = vmatpush1.msra.mxu0 0.0
    %558 = vmatprep.subr.mxu0 0.0
    %559 = vmatpush1.msra.mxu0 0.0
    %560 = vmatprep.subr.mxu0 0.0
    %561 = vmatpush1.msra.mxu0 0.0
    %562 = vmatprep.subr.mxu0 0.0
    %563 = vmatpush1.msra.mxu0 0.0
    %564 = vmatprep.subr.mxu0 0.0
    %565 = vmatpush1.msra.mxu0 0.0
    %566 = vmatprep.subr.mxu0 0.0
    %567 = vmatpush1.msra.mxu0 0.0
    %568 = vmatprep.subr.mxu0 0.0
    %569 = vmatpush1.msra.mxu0 0.0
    %570 = vmatprep.subr.mxu0 0.0
    %571 = vmatpush1.msra.mxu0 0.0
    %572 = vmatprep.subr.mxu0 0.0
    %573 = vmatpush1.msra.mxu0 0.0
    %574 = vmatprep.subr.mxu0 0.0
    %575 = vmatpush1.msra.mxu0 0.0
    %576 = vmatprep.subr.mxu0 0.0
    %577 = vmatpush1.msra.mxu0 0.0
    %578 = vmatprep.mubr.f32.mxu0 0.0
    %579 = vmatmul.mubr.f32.gmra.mrb[0].mxu0 %v475
    %v580 = vpop.f32.mrb[0].mxu0
    %v581 = vadd.f32 %v512, %v580
    %v582 = vpop.f32.mrb[0].mxu0
    %583 = vmatprep.mubr.f32.mxu0 0.0
    %584 = vmatmul.mubr.f32.gmra.mrb[0].mxu0 %v476
    %v585 = vpop.f32.mrb[0].mxu0
    %v586 = vadd.f32 %v512, %v585
    %v587 = vpop.f32.mrb[0].mxu0
    %588 = vmatprep.mubr.f32.mxu0 0.0
    %589 = vmatmul.mubr.f32.gmra.mrb[0].mxu0 %v477
    %v590 = vpop.f32.mrb[0].mxu0
    %v591 = vadd.f32 %v512, %v590
    %v592 = vpop.f32.mrb[0].mxu0
    %593 = vmatprep.mubr.f32.mxu0 0.0
    %594 = vmatmul.mubr.f32.gmra.mrb[0].mxu0 %v478
    %v595 = vpop.f32.mrb[0].mxu0
    %v596 = vadd.f32 %v512, %v595
    %v597 = vpop.f32.mrb[0].mxu0
    %598 = vmatprep.mubr.f32.mxu0 0.0
    %599 = vmatmul.mubr.f32.gmra.mrb[0].mxu0 %v479
    %v600 = vpop.f32.mrb[0].mxu0
    %v601 = vadd.f32 %v512, %v600
    %v602 = vpop.f32.mrb[0].mxu0
    %603 = vmatprep.mubr.f32.mxu0 0.0
    %604 = vmatmul.mubr.f32.gmra.mrb[0].mxu0 %v480
    %v605 = vpop.f32.mrb[0].mxu0
    %v606 = vadd.f32 %v512, %v605
    %v607 = vpop.f32.mrb[0].mxu0
    %608 = vmatprep.mubr.f32.mxu0 0.0
    %609 = vmatmul.mubr.f32.gmra.mrb[0].mxu0 %v481
    %v610 = vpop.f32.mrb[0].mxu0
    %v611 = vadd.f32 %v512, %v610
    %v612 = vpop.f32.mrb[0].mxu0
    %613 = vmatprep.mubr.f32.mxu0 0.0
    %614 = vmatmul.mubr.f32.gmra.mrb[0].mxu0 %v482
    %v615 = vpop.f32.mrb[0].mxu0
    %v616 = vadd.f32 %v512, %v615
    %v617 = vpop.f32.mrb[0].mxu0
    %618 = vmatprep.mubr.f32.mxu0 0.0
    %619 = vmatmul.mubr.f32.gmra.mrb[0].mxu0 %v483
    %v620 = vpop.f32.mrb[0].mxu0
    %v621 = vadd.f32 %v512, %v620
    %v622 = vpop.f32.mrb[0].mxu0
    %623 = vmatprep.mubr.f32.mxu0 0.0
    %624 = vmatmul.mubr.f32.gmra.mrb[0].mxu0 %v484
    %v625 = vpop.f32.mrb[0].mxu0
    %v626 = vadd.f32 %v512, %v625
    %v627 = vpop.f32.mrb[0].mxu0
    %628 = vmatprep.mubr.f32.mxu0 0.0
    %629 = vmatmul.mubr.f32.gmra.mrb[0].mxu0 %v485
    %v630 = vpop.f32.mrb[0].mxu0
    %v631 = vadd.f32 %v512, %v630
    %v632 = vpop.f32.mrb[0].mxu0
    %633 = vmatprep.mubr.f32.mxu0 0.0
    %634 = vmatmul.mubr.f32.gmra.mrb[0].mxu0 %v486
    %v635 = vpop.f32.mrb[0].mxu0
    %v636 = vadd.f32 %v512, %v635
    %v637 = vpop.f32.mrb[0].mxu0
    %638 = vmatprep.mubr.f32.mxu0 0.0
    %639 = vmatmul.mubr.f32.gmra.mrb[0].mxu0 %v487
    %v640 = vpop.f32.mrb[0].mxu0
    %v641 = vadd.f32 %v512, %v640
    %v642 = vpop.f32.mrb[0].mxu0
    %643 = vmatprep.mubr.f32.mxu0 0.0
    %644 = vmatmul.mubr.f32.gmra.mrb[0].mxu0 %v488
    %v645 = vpop.f32.mrb[0].mxu0
    %v646 = vadd.f32 %v512, %v645
    %v647 = vpop.f32.mrb[0].mxu0
    %648 = vmatprep.mubr.f32.mxu0 0.0
    %649 = vmatmul.mubr.f32.gmra.mrb[0].mxu0 %v489
    %v650 = vpop.f32.mrb[0].mxu0
    %v651 = vadd.f32 %v512, %v650
    %v652 = vpop.f32.mrb[0].mxu0
    %653 = vmatprep.mubr.f32.mxu0 0.0
    %654 = vmatmul.mubr.f32.gmra.mrb[0].mxu0 %v490
    %v655 = vpop.f32.mrb[0].mxu0
    %v656 = vadd.f32 %v512, %v655
    %v657 = vpop.f32.mrb[0].mxu0
    %658 = vdwg.mxu0
    %v659 = vmul.f32 %v472, %v472
    %660 = vadd.xlane.f32.xlu0 %v659
    %v661 = vpop.xlane.xlu0 %660
    %v662 = vmax.f32 %v661, 1e-12
    %v663 = vrsqrt.pop %v662
    %v664 = vmul.f32 %v472, %v663
    %v665 = vstv %s51
    %v666 = vmul.f32 %v664, %v665
    %v667 = vmul.f32 %v581, %v581
    %v668 = vmul.f32 %v586, %v586
    %v669 = vmul.f32 %v591, %v591
    %v670 = vmul.f32 %v596, %v596
    %v671 = vmul.f32 %v601, %v601
    %v672 = vmul.f32 %v606, %v606
    %v673 = vmul.f32 %v611, %v611
    %v674 = vmul.f32 %v616, %v616
    %v675 = vmul.f32 %v621, %v621
    %v676 = vmul.f32 %v626, %v626
    %v677 = vmul.f32 %v631, %v631
    %v678 = vmul.f32 %v636, %v636
    %v679 = vmul.f32 %v641, %v641
    %v680 = vmul.f32 %v646, %v646
    %v681 = vmul.f32 %v651, %v651
    %v682 = vmul.f32 %v656, %v656
    %683 = vadd.xlane.f32.xlu0 %v667
    %v684 = vpop.xlane.xlu0 %683
    %685 = vadd.xlane.f32.xlu0 %v668
    %v686 = vpop.xlane.xlu0 %685
    %687 = vadd.xlane.f32.xlu0 %v669
    %v688 = vpop.xlane.xlu0 %687
    %689 = vadd.xlane.f32.xlu0 %v670
    %v690 = vpop.xlane.xlu0 %689
    %691 = vadd.xlane.f32.xlu0 %v671
    %v692 = vpop.xlane.xlu0 %691
    %693 = vadd.xlane.f32.xlu0 %v672
    %v694 = vpop.xlane.xlu0 %693
    %695 = vadd.xlane.f32.xlu0 %v673
    %v696 = vpop.xlane.xlu0 %695
    %697 = vadd.xlane.f32.xlu0 %v674
    %v698 = vpop.xlane.xlu0 %697
    %699 = vadd.xlane.f32.xlu0 %v675
    %v700 = vpop.xlane.xlu0 %699
    %701 = vadd.xlane.f32.xlu0 %v676
    %v702 = vpop.xlane.xlu0 %701
    %703 = vadd.xlane.f32.xlu0 %v677
    %v704 = vpop.xlane.xlu0 %703
    %705 = vadd.xlane.f32.xlu0 %v678
    %v706 = vpop.xlane.xlu0 %705
    %707 = vadd.xlane.f32.xlu0 %v679
    %v708 = vpop.xlane.xlu0 %707
    %709 = vadd.xlane.f32.xlu0 %v680
    %v710 = vpop.xlane.xlu0 %709
    %711 = vadd.xlane.f32.xlu0 %v681
    %v712 = vpop.xlane.xlu0 %711
    %713 = vadd.xlane.f32.xlu0 %v682
    %v714 = vpop.xlane.xlu0 %713
    %v715 = vmax.f32 %v684, 1e-12
    %v716 = vmax.f32 %v686, 1e-12
    %v717 = vmax.f32 %v688, 1e-12
    %v718 = vmax.f32 %v690, 1e-12
    %v719 = vmax.f32 %v692, 1e-12
    %v720 = vmax.f32 %v694, 1e-12
    %v721 = vmax.f32 %v696, 1e-12
    %v722 = vmax.f32 %v698, 1e-12
    %v723 = vmax.f32 %v700, 1e-12
    %v724 = vmax.f32 %v702, 1e-12
    %v725 = vmax.f32 %v704, 1e-12
    %v726 = vmax.f32 %v706, 1e-12
    %v727 = vmax.f32 %v708, 1e-12
    %v728 = vmax.f32 %v710, 1e-12
    %v729 = vmax.f32 %v712, 1e-12
    %v730 = vmax.f32 %v714, 1e-12
    %v731 = vrsqrt.pop %v715
    %v732 = vrsqrt.pop %v716
    %v733 = vrsqrt.pop %v717
    %v734 = vrsqrt.pop %v718
    %v735 = vrsqrt.pop %v719
    %v736 = vrsqrt.pop %v720
    %v737 = vrsqrt.pop %v721
    %v738 = vrsqrt.pop %v722
    %v739 = vrsqrt.pop %v723
    %v740 = vrsqrt.pop %v724
    %v741 = vrsqrt.pop %v725
    %v742 = vrsqrt.pop %v726
    %v743 = vrsqrt.pop %v727
    %v744 = vrsqrt.pop %v728
    %v745 = vrsqrt.pop %v729
    %v746 = vrsqrt.pop %v730
    %v747 = vmul.f32 %v581, %v731
    %v748 = vmul.f32 %v586, %v732
    %v749 = vmul.f32 %v591, %v733
    %v750 = vmul.f32 %v596, %v734
    %v751 = vmul.f32 %v601, %v735
    %v752 = vmul.f32 %v606, %v736
    %v753 = vmul.f32 %v611, %v737
    %v754 = vmul.f32 %v616, %v738
    %v755 = vmul.f32 %v621, %v739
    %v756 = vmul.f32 %v626, %v740
    %v757 = vmul.f32 %v631, %v741
    %v758 = vmul.f32 %v636, %v742
    %v759 = vmul.f32 %v641, %v743
    %v760 = vmul.f32 %v646, %v744
    %v761 = vmul.f32 %v651, %v745
    %v762 = vmul.f32 %v656, %v746
    %763 = vmatprep.subr.mxu0 0.0
    %764 = vmatpush1.xpose.msra.mxu0 %v747
    %765 = vmatprep.subr.mxu0 0.0
    %766 = vmatpush1.xpose.msra.mxu0 %v748
    %767 = vmatprep.subr.mxu0 0.0
    %768 = vmatpush1.xpose.msra.mxu0 %v749
    %769 = vmatprep.subr.mxu0 0.0
    %770 = vmatpush1.xpose.msra.mxu0 %v750
    %771 = vmatprep.subr.mxu0 0.0
    %772 = vmatpush1.xpose.msra.mxu0 %v751
    %773 = vmatprep.subr.mxu0 0.0
    %774 = vmatpush1.xpose.msra.mxu0 %v752
    %775 = vmatprep.subr.mxu0 0.0
    %776 = vmatpush1.xpose.msra.mxu0 %v753
    %777 = vmatprep.subr.mxu0 0.0
    %778 = vmatpush1.xpose.msra.mxu0 %v754
    %779 = vmatprep.subr.mxu0 0.0
    %780 = vmatpush1.xpose.msra.mxu0 %v755
    %781 = vmatprep.subr.mxu0 0.0
    %782 = vmatpush1.xpose.msra.mxu0 %v756
    %783 = vmatprep.subr.mxu0 0.0
    %784 = vmatpush1.xpose.msra.mxu0 %v757
    %785 = vmatprep.subr.mxu0 0.0
    %786 = vmatpush1.xpose.msra.mxu0 %v758
    %787 = vmatprep.subr.mxu0 0.0
    %788 = vmatpush1.xpose.msra.mxu0 %v759
    %789 = vmatprep.subr.mxu0 0.0
    %790 = vmatpush1.xpose.msra.mxu0 %v760
    %791 = vmatprep.subr.mxu0 0.0
    %792 = vmatpush1.xpose.msra.mxu0 %v761
    %793 = vmatprep.subr.mxu0 0.0
    %794 = vmatpush1.xpose.msra.mxu0 %v762
    %795 = vmatprep.subr.mxu0 0.0
    %796 = vmatpush1.xpose.msra.mxu0 0.0
    %797 = vmatprep.subr.mxu0 0.0
    %798 = vmatpush1.xpose.msra.mxu0 0.0
    %799 = vmatprep.subr.mxu0 0.0
    %800 = vmatpush1.xpose.msra.mxu0 0.0
    %801 = vmatprep.subr.mxu0 0.0
    %802 = vmatpush1.xpose.msra.mxu0 0.0
    %803 = vmatprep.subr.mxu0 0.0
    %804 = vmatpush1.xpose.msra.mxu0 0.0
    %805 = vmatprep.subr.mxu0 0.0
    %806 = vmatpush1.xpose.msra.mxu0 0.0
    %807 = vmatprep.subr.mxu0 0.0
    %808 = vmatpush1.xpose.msra.mxu0 0.0
    %809 = vmatprep.subr.mxu0 0.0
    %810 = vmatpush1.xpose.msra.mxu0 0.0
    %811 = vmatprep.subr.mxu0 0.0
    %812 = vmatpush1.xpose.msra.mxu0 0.0
    %813 = vmatprep.subr.mxu0 0.0
    %814 = vmatpush1.xpose.msra.mxu0 0.0
    %815 = vmatprep.subr.mxu0 0.0
    %816 = vmatpush1.xpose.msra.mxu0 0.0
    %817 = vmatprep.subr.mxu0 0.0
    %818 = vmatpush1.xpose.msra.mxu0 0.0
    %819 = vmatprep.subr.mxu0 0.0
    %820 = vmatpush1.xpose.msra.mxu0 0.0
    %821 = vmatprep.subr.mxu0 0.0
    %822 = vmatpush1.xpose.msra.mxu0 0.0
    %823 = vmatprep.subr.mxu0 0.0
    %824 = vmatpush1.xpose.msra.mxu0 0.0
    %825 = vmatprep.subr.mxu0 0.0
    %826 = vmatpush1.xpose.msra.mxu0 0.0
    %827 = vmatprep.mubr.f32.mxu0 0.0
    %828 = vmatmul.mubr.f32.gmra.mrb[0].mxu0 %v666
    %v829 = vpop.f32.mrb[0].mxu0
    %v830 = vadd.f32 0.0, %v829
    %v831 = vpop.f32.mrb[0].mxu0
    %832 = vdwg.mxu0
    %v833 = vld [vmem:[%s7] sm:$0xff]
    %v834 = vld [vmem:[%s8] sm:$0xff]
    %v835 = vld [vmem:[%s8 + $0x8] sm:$0xff]
    %v836 = vld [vmem:[%s8 + $0x10] sm:$0xff]
    %v837 = vld [vmem:[%s8 + $0x18] sm:$0xff]
    %v838 = vld [vmem:[%s8 + $0x20] sm:$0xff]
    %v839 = vld [vmem:[%s8 + $0x28] sm:$0xff]
    %v840 = vld [vmem:[%s8 + $0x30] sm:$0xff]
    %v841 = vld [vmem:[%s8 + $0x38] sm:$0xff]
    %v842 = vld [vmem:[%s8 + $0x40] sm:$0xff]
    %v843 = vld [vmem:[%s8 + $0x48] sm:$0xff]
    %v844 = vld [vmem:[%s8 + $0x50] sm:$0xff]
    %v845 = vld [vmem:[%s8 + $0x58] sm:$0xff]
    %v846 = vld [vmem:[%s8 + $0x60] sm:$0xff]
    %v847 = vld [vmem:[%s8 + $0x68] sm:$0xff]
    %v848 = vld [vmem:[%s8 + $0x70] sm:$0xff]
    %v849 = vld [vmem:[%s8 + $0x78] sm:$0xff]
    %850 = vmatprep.subr.mxu0 0.0
    %851 = vmatpush1.xpose.msra.mxu0 %v834
    %852 = vmatprep.subr.mxu0 0.0
    %853 = vmatpush1.xpose.msra.mxu0 %v835
    %854 = vmatprep.subr.mxu0 0.0
    %855 = vmatpush1.xpose.msra.mxu0 %v836
    %856 = vmatprep.subr.mxu0 0.0
    %857 = vmatpush1.xpose.msra.mxu0 %v837
    %858 = vmatprep.subr.mxu0 0.0
    %859 = vmatpush1.xpose.msra.mxu0 %v838
    %860 = vmatprep.subr.mxu0 0.0
    %861 = vmatpush1.xpose.msra.mxu0 %v839
    %862 = vmatprep.subr.mxu0 0.0
    %863 = vmatpush1.xpose.msra.mxu0 %v840
    %864 = vmatprep.subr.mxu0 0.0
    %865 = vmatpush1.xpose.msra.mxu0 %v841
    %866 = vmatprep.subr.mxu0 0.0
    %867 = vmatpush1.xpose.msra.mxu0 %v842
    %868 = vmatprep.subr.mxu0 0.0
    %869 = vmatpush1.xpose.msra.mxu0 %v843
    %870 = vmatprep.subr.mxu0 0.0
    %871 = vmatpush1.xpose.msra.mxu0 %v844
    %872 = vmatprep.subr.mxu0 0.0
    %873 = vmatpush1.xpose.msra.mxu0 %v845
    %874 = vmatprep.subr.mxu0 0.0
    %875 = vmatpush1.xpose.msra.mxu0 %v846
    %876 = vmatprep.subr.mxu0 0.0
    %877 = vmatpush1.xpose.msra.mxu0 %v847
    %878 = vmatprep.subr.mxu0 0.0
    %879 = vmatpush1.xpose.msra.mxu0 %v848
    %880 = vmatprep.subr.mxu0 0.0
    %881 = vmatpush1.xpose.msra.mxu0 %v849
    %882 = vmatprep.subr.mxu0 0.0
    %883 = vmatpush1.xpose.msra.mxu0 0.0
    %884 = vmatprep.subr.mxu0 0.0
    %885 = vmatpush1.xpose.msra.mxu0 0.0
    %886 = vmatprep.subr.mxu0 0.0
    %887 = vmatpush1.xpose.msra.mxu0 0.0
    %888 = vmatprep.subr.mxu0 0.0
    %889 = vmatpush1.xpose.msra.mxu0 0.0
    %890 = vmatprep.subr.mxu0 0.0
    %891 = vmatpush1.xpose.msra.mxu0 0.0
    %892 = vmatprep.subr.mxu0 0.0
    %893 = vmatpush1.xpose.msra.mxu0 0.0
    %894 = vmatprep.subr.mxu0 0.0
    %895 = vmatpush1.xpose.msra.mxu0 0.0
    %896 = vmatprep.subr.mxu0 0.0
    %897 = vmatpush1.xpose.msra.mxu0 0.0
    %898 = vmatprep.subr.mxu0 0.0
    %899 = vmatpush1.xpose.msra.mxu0 0.0
    %900 = vmatprep.subr.mxu0 0.0
    %901 = vmatpush1.xpose.msra.mxu0 0.0
    %902 = vmatprep.subr.mxu0 0.0
    %903 = vmatpush1.xpose.msra.mxu0 0.0
    %904 = vmatprep.subr.mxu0 0.0
    %905 = vmatpush1.xpose.msra.mxu0 0.0
    %906 = vmatprep.subr.mxu0 0.0
    %907 = vmatpush1.xpose.msra.mxu0 0.0
    %908 = vmatprep.subr.mxu0 0.0
    %909 = vmatpush1.xpose.msra.mxu0 0.0
    %910 = vmatprep.subr.mxu0 0.0
    %911 = vmatpush1.xpose.msra.mxu0 0.0
    %912 = vmatprep.subr.mxu0 0.0
    %913 = vmatpush1.xpose.msra.mxu0 0.0
    %914 = vmatprep.mubr.f32.mxu0 0.0
    %915 = vmatmul.mubr.f32.gmra.mrb[0].mxu0 %v833
    %v916 = vpop.f32.mrb[0].mxu0
    %v917 = vadd.f32 0.0, %v916
    %v918 = vpop.f32.mrb[0].mxu0
    %919 = vdwg.mxu0
    %920 = vst [vmem:[#allocation7] sm:$0xff] %v830
    %v921 = vlaneseq
    %v922 = vand.u32 %v921, 127
    %vm923 = vcmp.lt.s32.totalorder %v922, 8
    %v924 = vlaneseq
    %v925 = vshrl.u32 %v924, 7
    %vm926 = vcmp.lt.s32.totalorder %v925, 8
    %v927 = vsel %vm923, 1, 0
    %vm928 = vcmp.eq.s32.totalorder %v927, 1
    %v929 = vsel %vm928, %v830, -1e+30
    %930 = vmax.xlane.f32.xlu0 %v929
    %v931 = vpop.xlane.xlu0 %930
    %v932 = vsub.f32 %v929, %v931
    %v933 = vmul.f32 %v932, 1.442695
    %v934 = vpow.pop %v933
    %935 = vadd.xlane.f32.xlu0 %v934
    %v936 = vpop.xlane.xlu0 %935
    %v937 = vlog2.pop %v936
    %v938 = vmul.f32 %v937, 0.6931472
    %v939 = vsub.f32 %v932, %v938
    %v940 = vsel %vm928, %v917, -1e+30
    %941 = vmax.xlane.f32.xlu0 %v940
    %v942 = vpop.xlane.xlu0 %941
    %v943 = vsub.f32 %v940, %v942
    %v944 = vmul.f32 %v943, 1.442695
    %v945 = vpow.pop %v944
    %946 = vadd.xlane.f32.xlu0 %v945
    %v947 = vpop.xlane.xlu0 %946
    %v948 = vlog2.pop %v947
    %v949 = vmul.f32 %v948, 0.6931472
    %v950 = vsub.f32 %v943, %v949
    %v951 = vmul.f32 %v950, 1.442695
    %v952 = vpow.pop %v951
    %v953 = vmul.f32 %v952, %v939
    %v954 = vsel %vm926, 1, 0
    %vm955 = vcmp.eq.s32.totalorder %v954, 1
    %v956 = vsel %vm955, %v953, 0.0
    %957 = vadd.xlane.f32.xlu0 %v956
    %v958 = vpop.xlane.xlu0 %957
    %v959 = vrot.slane %v958, 4
    %v960 = vadd.f32 %v958, %v959
    %v961 = vrot.slane %v960, 2
    %v962 = vadd.f32 %v960, %v961
    %v963 = vrot.slane %v962, 1
    %v964 = vadd.f32 %v962, %v963
    %s965 = vtos %v964
    %s966 = ssub.f32 0.0, %s965
    %s967 = smul.f32 %s966, 0.125
    %v968 = vsel %vm955, %v830, -1e+30
    %v969 = vrot.slane %v968, 4
    %v970 = vmax.f32 %v968, %v969
    %v971 = vrot.slane %v970, 2
    %v972 = vmax.f32 %v970, %v971
    %v973 = vrot.slane %v972, 1
    %v974 = vmax.f32 %v972, %v973
    %v975 = vsub.f32 %v968, %v974
    %v976 = vmul.f32 %v975, 1.442695
    %v977 = vpow.pop %v976
    %v978 = vrot.slane %v977, 4
    %v979 = vadd.f32 %v977, %v978
    %v980 = vrot.slane %v979, 2
    %v981 = vadd.f32 %v979, %v980
    %v982 = vrot.slane %v981, 1
    %v983 = vadd.f32 %v981, %v982
    %v984 = vlog2.pop %v983
    %v985 = vmul.f32 %v984, 0.6931472
    %v986 = vsub.f32 %v975, %v985
    %v987 = vsel %vm955, %v917, -1e+30
    %v988 = vrot.slane %v987, 4
    %v989 = vmax.f32 %v987, %v988
    %v990 = vrot.slane %v989, 2
    %v991 = vmax.f32 %v989, %v990
    %v992 = vrot.slane %v991, 1
    %v993 = vmax.f32 %v991, %v992
    %v994 = vsub.f32 %v987, %v993
    %v995 = vmul.f32 %v994, 1.442695
    %v996 = vpow.pop %v995
    %v997 = vrot.slane %v996, 4
    %v998 = vadd.f32 %v996, %v997
    %v999 = vrot.slane %v998, 2
    %v1000 = vadd.f32 %v998, %v999
    %v1001 = vrot.slane %v1000, 1
    %v1002 = vadd.f32 %v1000, %v1001
    %v1003 = vlog2.pop %v1002
    %v1004 = vmul.f32 %v1003, 0.6931472
    %v1005 = vsub.f32 %v994, %v1004
    %v1006 = vmul.f32 %v1005, 1.442695
    %v1007 = vpow.pop %v1006
    %v1008 = vmul.f32 %v1007, %v986
    %v1009 = vsel %vm928, %v1008, 0.0
    %1010 = vadd.xlane.f32.xlu0 %v1009
    %v1011 = vpop.xlane.xlu0 %1010
    %v1012 = vrot.slane %v1011, 4
    %v1013 = vadd.f32 %v1011, %v1012
    %v1014 = vrot.slane %v1013, 2
    %v1015 = vadd.f32 %v1013, %v1014
    %v1016 = vrot.slane %v1015, 1
    %v1017 = vadd.f32 %v1015, %v1016
    %s1018 = vtos %v1017
    %s1019 = ssub.f32 0.0, %s1018
    %s1020 = smul.f32 %s1019, 0.125
    %s1021 = sadd.f32 %s967, %s1020
    %s1022 = smul.f32 %s1021, 0.5
    %s1023 = scalar_lea.smem [#allocation8], 0
    %1024 = sst [smem:[%s1023]] %s1022
    // Predicated region
    $region42: #{image_text_contrastive_loss_forward.1} parent=1 // pred_check
      _
    $region43: #{image_text_contrastive_loss_forward.1} parent=1 // pred_check_branch
      %1026 = sbr.rel (0) target = $region45
    $region44: #{image_text_contrastive_loss_forward.1} parent=1 // pred_region
      %s1028 = ssub.s32 128, 128
      %1029 = vsyncadd [#allocation5], %s1028
      %s1031 = sshll.u32 [#allocation7], 4
      %s1032 = int_to_ptr.vmem [resolvable:$true] %s1031
      %1034 = dma.vmem_to_hbm [thread:$0]  %s1032, 128, %s9, [#allocation5]
    $region45: #{image_text_contrastive_loss_forward.1} parent=1 // pred_fallthru
      _
    // Predicated region
    $region46: #{image_text_contrastive_loss_forward.1} parent=1 // pred_check
      _
    $region47: #{image_text_contrastive_loss_forward.1} parent=1 // pred_check_branch
      %1036 = sbr.rel (0) target = $region49
    $region48: #{image_text_contrastive_loss_forward.1} parent=1 // pred_region
      %s1038 = ssub.s32 16, 16
      %1039 = vsyncadd [#allocation6], %s1038
      %1042 = dma.smem_to_hbm [#allocation8], 16, %s10, [#allocation6]
    $region49: #{image_text_contrastive_loss_forward.1} parent=1 // pred_fallthru
      _
    // Predicated region
    $region50: #{image_text_contrastive_loss_forward.1} parent=1 // pred_check
      _
    $region51: #{image_text_contrastive_loss_forward.1} parent=1 // pred_check_branch
      %1044 = sbr.rel (0) target = $region53
    $region52: #{image_text_contrastive_loss_forward.1} parent=1 // pred_region
      %1045 = dma.done [#allocation5], 128
    $region53: #{image_text_contrastive_loss_forward.1} parent=1 // pred_fallthru
      _
    // Predicated region
    $region54: #{image_text_contrastive_loss_forward.1} parent=1 // pred_check
      _
    $region55: #{image_text_contrastive_loss_forward.1} parent=1 // pred_check_branch
      %1047 = sbr.rel (0) target = $region57
    $region56: #{image_text_contrastive_loss_forward.1} parent=1 // pred_region
      %1048 = dma.done [#allocation6], 16
    $region57: #{image_text_contrastive_loss_forward.1} parent=1 // pred_fallthru
      _
    %1049 = sfence
    %1050 = vsyncpa [#allocation4], 1
    %1051 = vsyncpa [#allocation5], 1
    %1052 = vsyncpa [#allocation6], 1

</llo_original>
